<compile_context>
chip_gen: v5e
topology: v5e:2x2
jax: 0.10.0
libtpu: 0.0.40
codegen_flags: <defaults>
</compile_context>

<pallas_src>
import warnings

import jax
import jax.numpy as jnp
from jax.experimental import pallas as pl
from jax.experimental.pallas import tpu as pltpu

# XLA emits a UserWarning if a donated buffer ends up unused on some path;
# that is performance-only noise, keep the run output clean.
warnings.filterwarnings("ignore", message="Some donated buffers were not usable")

GAMMA = 1.25   # transform t1 parameter (deterministic "weight")
P = 0.5        # RandomApply probability (default)


def _transform_chain_kernel(x_ref, beta_ref, o_ref):
    """Apply the transform chain to one (row_block, lane_block) tile.

    beta_ref is a lane-dense (row_block, 128) slab; column 0 carries the
    per-row (per-channel) bias, broadcast over the lane axis of the x tile.
    """
    bias = beta_ref[:, 0:1]                                   # (row_block, 1)
    # t1: scale, t2: per-channel additive bias (sequential, fused)
    o_ref[...] = x_ref[...] * jnp.asarray(GAMMA, x_ref.dtype) + bias


def _pick_blocks(rows, lanes, itemsize, target_bytes=4 << 20):
    """Pick (row_block, lane_block) for a bandwidth-bound streaming kernel.

    * lane-dense: lane_block is a multiple of 128 (or the full lane extent).
    * row_block is a multiple of the dtype's sublane pack (8 for f32,
      16 for bf16) or the full row extent.
    * ~4 MiB per x block: amortizes per-grid-step overhead while keeping the
      double-buffered working set far below v7x's VMEM.
    * prefer >= 2 blocks on the leading (row) axis so the "parallel" axis can
      shard across the 2 TensorCores on v7x.
    """
    sub = max(8, 32 // itemsize)                      # sublane packing
    if sub * lanes * itemsize <= target_bytes:
        lane_block = lanes                            # full lane extent
    else:
        divs = [d for d in range(128, lanes + 1, 128)
                if lanes % d == 0 and sub * d * itemsize <= target_bytes]
        lane_block = max(divs) if divs else 128

    row_budget = max(sub, target_bytes // max(1, lane_block * itemsize))
    cands = [r for r in range(sub, rows + 1, sub) if rows % r == 0]
    if not cands:                                     # tiny / unaligned rows
        return rows, lane_block
    fit = [r for r in cands if r <= row_budget] or [cands[0]]
    pref = [r for r in fit if rows // r >= 2]         # keep megacore busy
    row_block = max(pref) if pref else max(fit)
    return row_block, lane_block


def _run_transform(x2d, beta_lane):
    """pallas_call launching the transform chain over a (rows, lanes) image."""
    rows, lanes = x2d.shape
    itemsize = x2d.dtype.itemsize
    row_block, lane_block = _pick_blocks(rows, lanes, itemsize)
    grid = (rows // row_block, lanes // lane_block)

    # double-buffered working set: 2 * (x block + out block) + 2 * beta block
    blk_bytes = row_block * lane_block * itemsize
    working = 2 * (2 * blk_bytes + row_block * 128 * itemsize)
    vmem_limit = int(min(max(working + (4 << 20), 8 << 20), 32 << 20))

    return pl.pallas_call(
        _transform_chain_kernel,
        out_shape=jax.ShapeDtypeStruct(x2d.shape, x2d.dtype),
        grid=grid,
        in_specs=[
            pl.BlockSpec((row_block, lane_block), lambda i, j: (i, j)),
            pl.BlockSpec((row_block, 128), lambda i, j: (i, 0)),
        ],
        out_specs=pl.BlockSpec((row_block, lane_block), lambda i, j: (i, j)),
        compiler_params=pltpu.CompilerParams(
            dimension_semantics=("parallel", "parallel"),
            vmem_limit_bytes=vmem_limit),
        # operand 0 is x2d (no scalar prefetch => unambiguous numbering);
        # identical in/out index maps => each tile is read before writeback.
        input_output_aliases={0: 0},
    )(x2d, beta_lane)


def random_apply(x_nchw, beta_c, key, p=P):
    """Apply the transform chain to x with probability p (single global coin)."""
    N, C, H, W = x_nchw.shape
    rows, lanes = N * C, H * W
    # Lane-dense guardrail: last dim must be a multiple of 128 so stores are
    # unmasked full-lane vst (pad upstream if this ever fails).
    assert lanes % 128 == 0, "H*W must be a multiple of 128 (lane-dense layout)"

    x2d = x_nchw.reshape(rows, lanes)
    # per-row bias: row r corresponds to channel r % C; lane-dense (rows, 128)
    beta_rows = jnp.tile(beta_c.astype(x2d.dtype), (N,)).reshape(rows, 1)
    beta_lane = jnp.broadcast_to(beta_rows, (rows, 128))

    # torch: `if self.p < torch.rand(1): return args`  =>  apply iff r <= p
    r = jax.random.uniform(key, (), dtype=jnp.float32)
    apply = r <= jnp.asarray(p, jnp.float32)

    # Gate the *launch*: skip path costs zero HBM traffic (no copy kernel).
    out2d = jax.lax.cond(
        apply,
        lambda xb, bb: _run_transform(xb, bb),
        lambda xb, bb: xb,
        x2d, beta_lane)
    return out2d.reshape(N, C, H, W)


# Donate the image so input_output_aliases={0: 0} can reuse the HBM buffer.
random_apply_jit = jax.jit(random_apply, donate_argnums=(0,))


if __name__ == "__main__":
    base_key = jax.random.PRNGKey(0)
    shape = (2, 4, 16, 16)
    beta = jnp.arange(4, dtype=jnp.float32) * 0.1    # transform t2 parameter

    # ---- apply path (p = 1.0 -> r <= p) ------------------------------------
    x_a = jax.random.normal(base_key, shape, dtype=jnp.float32)
    coin_a = jax.random.uniform(jax.random.PRNGKey(1), (), dtype=jnp.float32)
    expected_a = jnp.where(coin_a <= jnp.float32(1.0),
                           x_a * jnp.float32(GAMMA) + beta.reshape(1, 4, 1, 1),
                           x_a)
    out_a = random_apply_jit(x_a, beta, jax.random.PRNGKey(1), 1.0)
    jax.block_until_ready(out_a)

    # ---- skip path (p = 0.0 -> identity) ------------------------------------
    x_s = jax.random.normal(base_key, shape, dtype=jnp.float32)   # same content
    coin_s = jax.random.uniform(jax.random.PRNGKey(2), (), dtype=jnp.float32)
    expected_s = jnp.where(coin_s <= jnp.float32(0.0),
                           x_s * jnp.float32(GAMMA) + beta.reshape(1, 4, 1, 1),
                           x_s)
    out_s = random_apply_jit(x_s, beta, jax.random.PRNGKey(2), 0.0)
    jax.block_until_ready(out_s)

    assert out_a.shape == shape and out_a.dtype == jnp.float32
    assert out_s.shape == shape and out_s.dtype == jnp.float32
    assert jnp.allclose(out_a, expected_a, rtol=1e-5, atol=1e-5)
    assert jnp.allclose(out_s, expected_s, rtol=1e-5, atol=1e-5)
    print("KERNEL_OK")
</pallas_src>

<mosaic_0001>
module attributes {stable_mosaic.version = 11 : i64} {
  func.func @_transform_chain_kernel(%arg0: i32, %arg1: i32, %arg2: memref<8x256xf32, #tpu.memory_space<vmem>>, %arg3: memref<8x128xf32, #tpu.memory_space<vmem>>, %arg4: memref<8x256xf32, #tpu.memory_space<vmem>>) attributes {dimension_semantics = [#tpu.dimension_semantics<parallel>, #tpu.dimension_semantics<parallel>], iteration_bounds = array<i64: 1, 1>, scalar_prefetch = 0 : i64, scratch_operands = 0 : i64, tpu.core_type = #tpu.core_type<tc>, window_params = [{transform_indices = @transform_0, window_bounds = array<i64: 8, 256>}, {transform_indices = @transform_1, window_bounds = array<i64: 8, 128>}, {transform_indices = @transform_2, window_bounds = array<i64: 8, 256>}]} {
    %c0 = arith.constant 0 : index
    %c0_0 = arith.constant 0 : index
    %0 = vector.load %arg3[%c0, %c0_0] : memref<8x128xf32, #tpu.memory_space<vmem>>, vector<8x1xf32>
    %c0_1 = arith.constant 0 : index
    %c0_2 = arith.constant 0 : index
    %1 = vector.load %arg2[%c0_1, %c0_2] : memref<8x256xf32, #tpu.memory_space<vmem>>, vector<8x256xf32>
    %cst = arith.constant 1.250000e+00 : f32
    %2 = vector.broadcast %cst : f32 to vector<8x256xf32>
    %3 = arith.mulf %1, %2 : vector<8x256xf32>
    %4 = vector.broadcast %0 : vector<8x1xf32> to vector<8x256xf32>
    %5 = arith.addf %3, %4 : vector<8x256xf32>
    %c0_3 = arith.constant 0 : index
    %c0_4 = arith.constant 0 : index
    %6 = vector.load %arg4[%c0_3, %c0_4] : memref<8x256xf32, #tpu.memory_space<vmem>>, vector<8x256xf32>
    tpu.vector_store %arg4[%c0_3, %c0_4], %5 {strides = array<i32>} : memref<8x256xf32, #tpu.memory_space<vmem>>, vector<8x256xf32>,
    return
  }
  func.func @transform_0(%arg0: i32, %arg1: i32) -> (i32, i32) {
    %c0_i32 = arith.constant 0 : i32
    return %arg0, %arg1 : i32, i32
  }
  func.func @transform_1(%arg0: i32, %arg1: i32) -> (i32, i32) {
    %c0_i32 = arith.constant 0 : i32
    %c0_i32_0 = arith.constant 0 : i32
    return %arg0, %c0_i32 : i32, i32
  }
  func.func @transform_2(%arg0: i32, %arg1: i32) -> (i32, i32) {
    %c0_i32 = arith.constant 0 : i32
    return %arg0, %arg1 : i32, i32
  }
}

</mosaic_0001>

<llo_original>
// kernel: tile.0
$region0: #{tile.0}
  #allocation0 [shape = 's32[1]{0}', space=sflag, size = 0x4, scoped, tag = 'scoped memory for tile.0']
  %s0 = inlined_call_operand.vmem [shape: f32[4], index: 0, kind: input, shape index: {}]
  %s1 = inlined_call_operand.vmem [shape: f32[2,4], index: 1, kind: output, shape index: {}]
  // Predicated region
  $region2: #{tile.0} parent=0 // pred_check
    _
  $region3: #{tile.0} parent=0 // pred_check_branch
    %3 = sbr.rel (0) target = $region5
  $region4: #{tile.0} parent=0 // pred_region
    _
  $region5: #{tile.0} parent=0 // pred_fallthru
    _
  %v4 = vld [vmem:[%s0] ss:$0 sm:$0xff]
  %5 = vst [vmem:[%s1] sm:$0x3] %v4

// kernel: branch_1_fun.1
$region0: #{branch_1_fun.1}
  #allocation0 [shape = 'u32[]', space=smem, size = 0x4, offset = 0x4, fixed_abs, tag = 'smem constant byte address 0x4 - core index']
  #allocation1 [shape = 'u32[72,128]{1,0:T(1,128)}', space=vmem, size = 0x9000, scoped, tag = 'internal scratch']
  %s0 = inlined_call_operand.vmem [shape: f32[8,256], index: 0, kind: input, shape index: {}, may-alias: {0,2}]
  %s1 = inlined_call_operand.vmem [shape: f32[8,128], index: 1, kind: input, shape index: {}]
  %s2 = inlined_call_operand.vmem [shape: f32[8,256], index: 2, kind: output, shape index: {}, may-alias: {0,2}]
  %s3 = sld [smem:[#allocation0]]
  $region18: #{branch_1_fun.1} parent=0
    _
  %s5 = ssub.s32 1, %s3
  %s6 = scalar_select 0, %s5, %s3
  // Predicated region
  $region2: #{branch_1_fun.1} parent=0 // pred_check
    _
  $region3: #{branch_1_fun.1} parent=0 // pred_check_branch
    %8 = sbr.rel (0) target = $region5
  $region4: #{branch_1_fun.1} parent=0 // pred_region
    _
  $region5: #{branch_1_fun.1} parent=0 // pred_fallthru
    _
  // Predicated region
  $region6: #{branch_1_fun.1} parent=0 // pred_check
    _
  $region7: #{branch_1_fun.1} parent=0 // pred_check_branch
    %10 = sbr.rel (0) target = $region9
  $region8: #{branch_1_fun.1} parent=0 // pred_region
    _
  $region9: #{branch_1_fun.1} parent=0 // pred_fallthru
    _
  %v11 = vld [vmem:[%s1] sm:$0xff]
  %v12 = vld [vmem:[%s0] sm:$0xff]
  %v13 = vld [vmem:[%s0 + $0x8] sm:$0xff]
  %v14 = vmul.f32 %v12, 1.25
  %v15 = vmul.f32 %v13, 1.25
  %17 = vset.pattern.permute.xlu0 0
  %18 = vperm.xlu0 %17, %v11
  %v19 = vpop.permute.xlu0 %18
  %v21 = vadd.f32 %v14, %v19
  %v22 = vadd.f32 %v15, %v19
  %23 = vst [vmem:[%s2] sm:$0xff] %v21
  %24 = vst [vmem:[%s2 + $0x8] sm:$0xff] %v22
  // Predicated region
  $region10: #{branch_1_fun.1} parent=0 // pred_check
    _
  $region11: #{branch_1_fun.1} parent=0 // pred_check_branch
    %26 = sbr.rel (0) target = $region13
  $region12: #{branch_1_fun.1} parent=0 // pred_region
    _
  $region13: #{branch_1_fun.1} parent=0 // pred_fallthru
    _
  // Predicated region
  $region14: #{branch_1_fun.1} parent=0 // pred_check
    _
  $region15: #{branch_1_fun.1} parent=0 // pred_check_branch
    %28 = sbr.rel (0) target = $region17
  $region16: #{branch_1_fun.1} parent=0 // pred_region
    _
  $region17: #{branch_1_fun.1} parent=0 // pred_fallthru
    _

</llo_original>
